<compile_context>
chip_gen: v5e
topology: v5e:2x2
jax: 0.10.0
libtpu: 0.0.40
codegen_flags: <defaults>
</compile_context>

<pallas_src>
import jax
import jax.numpy as jnp
from jax.experimental import pallas as pl
from jax.experimental.pallas import tpu as pltpu

# ---------------------------------------------------------------------------
# Model configuration (synthetic, deterministic)
# ---------------------------------------------------------------------------
INPUT_DIM = 32      # e.g. hash-grid encoding width
HIDDEN_DIM = 128
OUTPUT_DIM = 16
OUT_PAD = 128       # lane-dense output slab; real columns are [:OUTPUT_DIM]
NUM_LAYERS = 3      # total linear layers: in->H, H->H, H->out
NUM_HIDDEN = NUM_LAYERS - 2   # number of H->H layers


# ---------------------------------------------------------------------------
# Pallas kernel: fused MLP over one batch tile
# ---------------------------------------------------------------------------
def fmlp_kernel(x_ref, w_in_ref, w_hid_ref, w_out_ref, o_ref):
    # x_ref:     (tile_n, INPUT_DIM)                    bf16
    # w_in_ref:  (INPUT_DIM, HIDDEN_DIM)                bf16
    # w_hid_ref: (NUM_HIDDEN, HIDDEN_DIM, HIDDEN_DIM)   bf16
    # w_out_ref: (HIDDEN_DIM, OUT_PAD)                  bf16 (zero-padded past OUTPUT_DIM)
    # o_ref:     (tile_n, OUT_PAD)                      f32
    h = jnp.dot(x_ref[...], w_in_ref[...], preferred_element_type=jnp.float32)
    h = jnp.maximum(h, 0.0)                    # ReLU on f32 accumulator (VPU)
    for l in range(NUM_HIDDEN):                # static unroll; weights resident in VMEM
        h = jnp.dot(h.astype(jnp.bfloat16), w_hid_ref[l],
                    preferred_element_type=jnp.float32)
        h = jnp.maximum(h, 0.0)
    out = jnp.dot(h.astype(jnp.bfloat16), w_out_ref[...],
                  preferred_element_type=jnp.float32)
    o_ref[...] = out.astype(o_ref.dtype)


def _pick_tile_n(n):
    """Large tiles amortize ~0.35us/grid-step overhead; keep grid >= 2 when possible
    so both v7x TensorCores get work.  Sweet spot 512-1024 on all generations."""
    tile = 1024
    while tile > 128 and 2 * tile > n:
        tile //= 2
    return max(tile, 128)


def model_helper_forward(x, params, *, tile_n=None):
    """Equivalent of ModelHelper.forward: run the single FMLP child."""
    w_in, w_hid, w_out = params
    n = x.shape[0]
    if tile_n is None:
        tile_n = _pick_tile_n(n)
    n_pad = pl.cdiv(n, tile_n) * tile_n
    grid = (n_pad // tile_n,)

    # bf16 MXU inputs (native on v5e/v6e/v7x; halves HBM->VMEM bytes).
    x_bf = x.astype(jnp.bfloat16)
    if n_pad != n:
        x_bf = jnp.pad(x_bf, ((0, n_pad - n), (0, 0)))
    w_in_bf = w_in.astype(jnp.bfloat16)
    w_hid_bf = w_hid.astype(jnp.bfloat16)
    # Zero-pad w_out so the output store is lane-dense (unmasked vst); slice later.
    w_out_bf = jnp.pad(w_out, ((0, 0), (0, OUT_PAD - OUTPUT_DIM))).astype(jnp.bfloat16)

    flops = 2 * n_pad * (INPUT_DIM * HIDDEN_DIM
                         + NUM_HIDDEN * HIDDEN_DIM * HIDDEN_DIM
                         + HIDDEN_DIM * OUT_PAD)
    bytes_accessed = (x_bf.size * 2 + w_in_bf.size * 2 + w_hid_bf.size * 2
                      + w_out_bf.size * 2 + n_pad * OUT_PAD * 4)

    out = pl.pallas_call(
        fmlp_kernel,
        out_shape=jax.ShapeDtypeStruct((n_pad, OUT_PAD), jnp.float32),
        grid_spec=pltpu.PrefetchScalarGridSpec(
            num_scalar_prefetch=0,
            grid=grid,
            in_specs=[
                pl.BlockSpec((tile_n, INPUT_DIM), lambda i: (i, 0)),
                pl.BlockSpec((INPUT_DIM, HIDDEN_DIM), lambda i: (0, 0)),
                pl.BlockSpec((NUM_HIDDEN, HIDDEN_DIM, HIDDEN_DIM),
                             lambda i: (0, 0, 0)),
                pl.BlockSpec((HIDDEN_DIM, OUT_PAD), lambda i: (0, 0)),
            ],
            out_specs=pl.BlockSpec((tile_n, OUT_PAD), lambda i: (i, 0)),
        ),
        compiler_params=pltpu.CompilerParams(
            dimension_semantics=("parallel",)),
        cost_estimate=pl.CostEstimate(flops=flops, transcendentals=0,
                                      bytes_accessed=bytes_accessed),
    )(x_bf, w_in_bf, w_hid_bf, w_out_bf)

    return out[:n, :OUTPUT_DIM]


def init_params(key):
    """Deterministic (He-style) init of FMLP weights, no biases."""
    k0, k1, k2 = jax.random.split(key, 3)
    w_in = jax.random.normal(k0, (INPUT_DIM, HIDDEN_DIM), jnp.float32) * (
        2.0 / INPUT_DIM) ** 0.5
    w_hid = jax.random.normal(
        k1, (NUM_HIDDEN, HIDDEN_DIM, HIDDEN_DIM), jnp.float32) * (
        2.0 / HIDDEN_DIM) ** 0.5
    w_out = jax.random.normal(k2, (HIDDEN_DIM, OUTPUT_DIM), jnp.float32) * (
        2.0 / HIDDEN_DIM) ** 0.5
    return (w_in, w_hid, w_out)


def reference_forward(x, params):
    """Pure-JAX reference with the same bf16-input / f32-accumulate numerics."""
    def bf(a):
        return a.astype(jnp.bfloat16).astype(jnp.float32)
    w_in, w_hid, w_out = params
    h = jnp.maximum(bf(x) @ bf(w_in), 0.0)
    for l in range(NUM_HIDDEN):
        h = jnp.maximum(bf(h) @ bf(w_hid[l]), 0.0)
    return bf(h) @ bf(w_out)


# TODO(synk): ModelHelper also supports torch_ngp.GridEncoder (hash-grid lookup) and
# arbitrary importlib-built subnets via cfg; only the FMLP path is kernelized here.

if __name__ == "__main__":
    key = jax.random.PRNGKey(0)
    kx, kp = jax.random.split(key)

    N = 256  # small batch of encoded points -> 2 grid steps (both v7x TCs busy)
    x = jax.random.normal(kx, (N, INPUT_DIM), jnp.float32)
    params = init_params(kp)

    # jit the whole forward so the wrapper-side cast/pad/slice fuse with the pallas_call
    # into one executable (no per-op dispatch, no extra HBM round-trips).
    fwd = jax.jit(lambda xx: model_helper_forward(xx, params))
    out = jax.block_until_ready(fwd(x))

    ref = reference_forward(x, params)
    assert out.shape == (N, OUTPUT_DIM)
    assert jnp.allclose(out, ref, atol=1e-2, rtol=1e-2), "mismatch vs reference"

    print("KERNEL_OK")
</pallas_src>

<mosaic_0001>
module attributes {stable_mosaic.version = 11 : i64} {
  func.func @fmlp_kernel(%arg0: i32, %arg1: memref<128x32xbf16, #tpu.memory_space<vmem>>, %arg2: memref<32x128xbf16, #tpu.memory_space<vmem>>, %arg3: memref<1x128x128xbf16, #tpu.memory_space<vmem>>, %arg4: memref<128x128xbf16, #tpu.memory_space<vmem>>, %arg5: memref<128x128xf32, #tpu.memory_space<vmem>>) attributes {dimension_semantics = [#tpu.dimension_semantics<parallel>], iteration_bounds = array<i64: 2>, scalar_prefetch = 0 : i64, scratch_operands = 0 : i64, tpu.core_type = #tpu.core_type<tc>, window_params = [{transform_indices = @transform_0, window_bounds = array<i64: 128, 32>}, {pipeline_mode = #tpu.pipeline_mode<synchronous>, transform_indices = @transform_1, window_bounds = array<i64: 32, 128>}, {pipeline_mode = #tpu.pipeline_mode<synchronous>, transform_indices = @transform_2, window_bounds = array<i64: 1, 128, 128>}, {pipeline_mode = #tpu.pipeline_mode<synchronous>, transform_indices = @transform_3, window_bounds = array<i64: 128, 128>}, {transform_indices = @transform_4, window_bounds = array<i64: 128, 128>}]} {
    %c0 = arith.constant 0 : index
    %c0_0 = arith.constant 0 : index
    %0 = vector.load %arg1[%c0, %c0_0] : memref<128x32xbf16, #tpu.memory_space<vmem>>, vector<128x32xbf16>
    %c0_1 = arith.constant 0 : index
    %c0_2 = arith.constant 0 : index
    %1 = vector.load %arg2[%c0_1, %c0_2] : memref<32x128xbf16, #tpu.memory_space<vmem>>, vector<32x128xbf16>
    %cst = arith.constant dense<0.000000e+00> : vector<128x128xf32>
    %2 = tpu.matmul %0, %1, %cst {dimension_numbers = #tpu.dot_dimension_numbers<[1], [0], [0], [1], [0, 0, 1, 1], [], []>} : vector<128x32xbf16>, vector<32x128xbf16>, vector<128x128xf32> -> vector<128x128xf32>
    %cst_3 = arith.constant 0.000000e+00 : f32
    %3 = vector.broadcast %cst_3 : f32 to vector<128x128xf32>
    %4 = arith.maximumf %2, %3 : vector<128x128xf32>
    %5 = arith.truncf %4 : vector<128x128xf32> to vector<128x128xbf16>
    %c0_4 = arith.constant 0 : index
    %c0_5 = arith.constant 0 : index
    %c0_6 = arith.constant 0 : index
    %6 = vector.load %arg3[%c0_4, %c0_5, %c0_6] : memref<1x128x128xbf16, #tpu.memory_space<vmem>>, vector<1x128x128xbf16>
    %7 = vector.shape_cast %6 : vector<1x128x128xbf16> to vector<128x128xbf16>
    %cst_7 = arith.constant dense<0.000000e+00> : vector<128x128xf32>
    %8 = tpu.matmul %5, %7, %cst_7 {dimension_numbers = #tpu.dot_dimension_numbers<[1], [0], [0], [1], [0, 0, 1, 1], [], []>} : vector<128x128xbf16>, vector<128x128xbf16>, vector<128x128xf32> -> vector<128x128xf32>
    %cst_8 = arith.constant 0.000000e+00 : f32
    %9 = vector.broadcast %cst_8 : f32 to vector<128x128xf32>
    %10 = arith.maximumf %8, %9 : vector<128x128xf32>
    %11 = arith.truncf %10 : vector<128x128xf32> to vector<128x128xbf16>
    %c0_9 = arith.constant 0 : index
    %c0_10 = arith.constant 0 : index
    %12 = vector.load %arg4[%c0_9, %c0_10] : memref<128x128xbf16, #tpu.memory_space<vmem>>, vector<128x128xbf16>
    %cst_11 = arith.constant dense<0.000000e+00> : vector<128x128xf32>
    %13 = tpu.matmul %11, %12, %cst_11 {dimension_numbers = #tpu.dot_dimension_numbers<[1], [0], [0], [1], [0, 0, 1, 1], [], []>} : vector<128x128xbf16>, vector<128x128xbf16>, vector<128x128xf32> -> vector<128x128xf32>
    %c0_12 = arith.constant 0 : index
    %c0_13 = arith.constant 0 : index
    %14 = vector.load %arg5[%c0_12, %c0_13] : memref<128x128xf32, #tpu.memory_space<vmem>>, vector<128x128xf32>
    tpu.vector_store %arg5[%c0_12, %c0_13], %13 {strides = array<i32>} : memref<128x128xf32, #tpu.memory_space<vmem>>, vector<128x128xf32>,
    return
  }
  func.func @transform_0(%arg0: i32) -> (i32, i32) {
    %c0_i32 = arith.constant 0 : i32
    %c0_i32_0 = arith.constant 0 : i32
    return %arg0, %c0_i32 : i32, i32
  }
  func.func @transform_1(%arg0: i32) -> (i32, i32) {
    %c0_i32 = arith.constant 0 : i32
    %c0_i32_0 = arith.constant 0 : i32
    %c0_i32_1 = arith.constant 0 : i32
    return %c0_i32, %c0_i32_0 : i32, i32
  }
  func.func @transform_2(%arg0: i32) -> (i32, i32, i32) {
    %c0_i32 = arith.constant 0 : i32
    %c0_i32_0 = arith.constant 0 : i32
    %c0_i32_1 = arith.constant 0 : i32
    %c0_i32_2 = arith.constant 0 : i32
    return %c0_i32, %c0_i32_0, %c0_i32_1 : i32, i32, i32
  }
  func.func @transform_3(%arg0: i32) -> (i32, i32) {
    %c0_i32 = arith.constant 0 : i32
    %c0_i32_0 = arith.constant 0 : i32
    %c0_i32_1 = arith.constant 0 : i32
    return %c0_i32, %c0_i32_0 : i32, i32
  }
  func.func @transform_4(%arg0: i32) -> (i32, i32) {
    %c0_i32 = arith.constant 0 : i32
    %c0_i32_0 = arith.constant 0 : i32
    return %arg0, %c0_i32 : i32, i32
  }
}

</mosaic_0001>

<llo_original>
// kernel: _lambda_.1
$region0: #{_lambda_.1}
  #allocation0 [shape = 'u32[]', space=smem, size = 0x4, offset = 0x4, fixed_abs, tag = 'smem constant byte address 0x4 - core index']
  #allocation1 [shape = 'u32[72,128]{1,0:T(1,128)}', space=vmem, size = 0x9000, scoped, tag = 'internal scratch']
  %s0 = inlined_call_operand.vmem [shape: bf16[256,32], index: 0, kind: input, shape index: {}]
  %s1 = inlined_call_operand.vmem [shape: bf16[32,128], index: 1, kind: input, shape index: {}]
  %s2 = inlined_call_operand.vmem [shape: bf16[1,128,128], index: 2, kind: input, shape index: {}]
  %s3 = inlined_call_operand.vmem [shape: bf16[128,128], index: 3, kind: input, shape index: {}]
  %s4 = inlined_call_operand.vmem [shape: f32[256,128], index: 4, kind: output, shape index: {}]
  %s5 = sld [smem:[#allocation0]]
  $region49: #{_lambda_.1} parent=0
    _
  %s7 = ssub.s32 1, %s5
  %s8 = scalar_select 0, %s7, %s5
  loop: start=0, step=1, limit=4
  $region2: #{_lambda_.1} parent=0 // loop_pre_header
    _
  $region3: #{_lambda_.1} parent=0 // loop_header
    %s10 = sphi 0, %s14
    %p11 = scmp.ge.s32.totalorder %s10, 4
    %s20 = sphi 0, %s22
    %s23 = sphi 0, %s20
    %s24 = sphi 0, %s23
    %s40 = sphi 0, %s24
    %s44 = sphi 0, %s44
    %s46 = sphi 0, %s44
    %s47 = sphi 0, %s46
    %s61 = sphi 0, %s47
    %s65 = sphi 0, %s65
    %s67 = sphi 0, %s65
    %s68 = sphi 0, %s67
    %s82 = sphi 0, %s68
    %s86 = sphi 0, %s86
    %s88 = sphi 0, %s86
    %s89 = sphi 0, %s88
    %s103 = sphi 0, %s89
    %s109 = sphi 0, %s111
    %s112 = sphi 0, %s109
    %s113 = sphi 0, %s112
    %s129 = sphi 0, %s113
  $region4: #{_lambda_.1} parent=0 // loop_header_branch
    %13 = sbr.rel (%p11) target = $region8
  $region5: #{_lambda_.1} parent=0 // loop_body
    %s15 = ssub.s32 %s10, 1
    %s16 = ssub.s32 %s10, 2
    %s17 = sadd.s32 %s10, 1
    %s18 = ssub.s32 %s10, %s17
    %p19 = scmp.eq.s32.totalorder %s18, 0
    %s21 = sadd.s32 %s20, 1
    %s22 = scalar_select %p19, %s20, %s21
    %p25 = pneg %p19
    %p26 = scmp.eq.s32.totalorder %s10, 1
    %p27 = por %p25, %p26
    %p28 = scmp.ne.s32.totalorder %s20, %s23
    %p29 = scmp.eq.s32.totalorder %s10, 0
    %p30 = por %p28, %p29
    %p31 = scmp.ne.s32.totalorder %s20, %s23
    %p32 = scmp.eq.s32.totalorder %s15, 1
    %p33 = por %p31, %p32
    %p34 = scmp.ne.s32.totalorder %s23, %s24
    %p35 = scmp.eq.s32.totalorder %s15, 0
    %p36 = por %p34, %p35
    %p37 = scmp.ne.s32.totalorder %s23, %s24
    %p38 = scmp.eq.s32.totalorder %s16, 1
    %p39 = por %p37, %p38
    %p41 = scmp.ne.s32.totalorder %s24, %s40
    %p42 = scmp.eq.s32.totalorder %s16, 0
    %p43 = por %p41, %p42
    %s45 = sadd.s32 %s44, 1
    %p48 = scmp.eq.s32.totalorder %s10, 1
    %p49 = scmp.ne.s32.totalorder %s44, %s46
    %p50 = scmp.eq.s32.totalorder %s10, 0
    %p51 = por %p49, %p50
    %p52 = scmp.ne.s32.totalorder %s44, %s46
    %p53 = scmp.eq.s32.totalorder %s15, 1
    %p54 = por %p52, %p53
    %p55 = scmp.ne.s32.totalorder %s46, %s47
    %p56 = scmp.eq.s32.totalorder %s15, 0
    %p57 = por %p55, %p56
    %p58 = scmp.ne.s32.totalorder %s46, %s47
    %p59 = scmp.eq.s32.totalorder %s16, 1
    %p60 = por %p58, %p59
    %p62 = scmp.ne.s32.totalorder %s47, %s61
    %p63 = scmp.eq.s32.totalorder %s16, 0
    %p64 = por %p62, %p63
    %s66 = sadd.s32 %s65, 1
    %p69 = scmp.eq.s32.totalorder %s10, 1
    %p70 = scmp.ne.s32.totalorder %s65, %s67
    %p71 = scmp.eq.s32.totalorder %s10, 0
    %p72 = por %p70, %p71
    %p73 = scmp.ne.s32.totalorder %s65, %s67
    %p74 = scmp.eq.s32.totalorder %s15, 1
    %p75 = por %p73, %p74
    %p76 = scmp.ne.s32.totalorder %s67, %s68
    %p77 = scmp.eq.s32.totalorder %s15, 0
    %p78 = por %p76, %p77
    %p79 = scmp.ne.s32.totalorder %s67, %s68
    %p80 = scmp.eq.s32.totalorder %s16, 1
    %p81 = por %p79, %p80
    %p83 = scmp.ne.s32.totalorder %s68, %s82
    %p84 = scmp.eq.s32.totalorder %s16, 0
    %p85 = por %p83, %p84
    %s87 = sadd.s32 %s86, 1
    %p90 = scmp.eq.s32.totalorder %s10, 1
    %p91 = scmp.ne.s32.totalorder %s86, %s88
    %p92 = scmp.eq.s32.totalorder %s10, 0
    %p93 = por %p91, %p92
    %p94 = scmp.ne.s32.totalorder %s86, %s88
    %p95 = scmp.eq.s32.totalorder %s15, 1
    %p96 = por %p94, %p95
    %p97 = scmp.ne.s32.totalorder %s88, %s89
    %p98 = scmp.eq.s32.totalorder %s15, 0
    %p99 = por %p97, %p98
    %p100 = scmp.ne.s32.totalorder %s88, %s89
    %p101 = scmp.eq.s32.totalorder %s16, 1
    %p102 = por %p100, %p101
    %p104 = scmp.ne.s32.totalorder %s89, %s103
    %p105 = scmp.eq.s32.totalorder %s16, 0
    %p106 = por %p104, %p105
    %s107 = ssub.s32 %s10, %s17
    %p108 = scmp.eq.s32.totalorder %s107, 0
    %s110 = sadd.s32 %s109, 1
    %s111 = scalar_select %p108, %s109, %s110
    %p114 = pneg %p108
    %p115 = scmp.eq.s32.totalorder %s10, 1
    %p116 = por %p114, %p115
    %p117 = scmp.ne.s32.totalorder %s109, %s112
    %p118 = scmp.eq.s32.totalorder %s10, 0
    %p119 = por %p117, %p118
    %p120 = scmp.ne.s32.totalorder %s109, %s112
    %p121 = scmp.eq.s32.totalorder %s15, 1
    %p122 = por %p120, %p121
    %p123 = scmp.ne.s32.totalorder %s112, %s113
    %p124 = scmp.eq.s32.totalorder %s15, 0
    %p125 = por %p123, %p124
    %p126 = scmp.ne.s32.totalorder %s112, %s113
    %p127 = scmp.eq.s32.totalorder %s16, 1
    %p128 = por %p126, %p127
    %p130 = scmp.ne.s32.totalorder %s113, %s129
    %p131 = scmp.eq.s32.totalorder %s16, 0
    %p132 = por %p130, %p131
    %p133 = scmp.le.s32.totalorder 1, %s10
    %p134 = scmp.lt.s32.totalorder %s10, 3
    %p135 = pnand %p133, %p134
    %p136 = pneg %p135
    // Predicated region
    $region9: #{_lambda_.1} parent=5 // pred_check
      _
    $region10: #{_lambda_.1} parent=5 // pred_check_branch
      %138 = sbr.rel (%p135) target = $region12
    $region11: #{_lambda_.1} parent=5 // pred_region
      %s139 = ssub.s32 %s10, 1
      // Predicated region
      $region13: #{_lambda_.1} parent=11 // pred_check
        %p140 = pneg %p57
      $region14: #{_lambda_.1} parent=11 // pred_check_branch
        %142 = sbr.rel (%p140) target = $region16
      $region15: #{_lambda_.1} parent=11 // pred_region
        _
      $region16: #{_lambda_.1} parent=11 // pred_fallthru
        _
      // Predicated region
      $region17: #{_lambda_.1} parent=11 // pred_check
        %p143 = pneg %p78
      $region18: #{_lambda_.1} parent=11 // pred_check_branch
        %145 = sbr.rel (%p143) target = $region20
      $region19: #{_lambda_.1} parent=11 // pred_region
        _
      $region20: #{_lambda_.1} parent=11 // pred_fallthru
        _
      // Predicated region
      $region21: #{_lambda_.1} parent=11 // pred_check
        %p146 = pneg %p99
      $region22: #{_lambda_.1} parent=11 // pred_check_branch
        %148 = sbr.rel (%p146) target = $region24
      $region23: #{_lambda_.1} parent=11 // pred_region
        _
      $region24: #{_lambda_.1} parent=11 // pred_fallthru
        _
    $region12: #{_lambda_.1} parent=5 // pred_fallthru
      _
    %p149 = scmp.lt.s32.totalorder %s10, 2
    // Predicated region
    $region25: #{_lambda_.1} parent=5 // pred_check
      %p150 = pneg %p149
    $region26: #{_lambda_.1} parent=5 // pred_check_branch
      %152 = sbr.rel (%p150) target = $region28
    $region27: #{_lambda_.1} parent=5 // pred_region
      // Predicated region
      $region29: #{_lambda_.1} parent=27 // pred_check
        %p153 = pneg %p30
      $region30: #{_lambda_.1} parent=27 // pred_check_branch
        %155 = sbr.rel (%p153) target = $region32
      $region31: #{_lambda_.1} parent=27 // pred_region
        %s156 = smul.u32 16, %s10
        %p157 = scmp.lt.s32.totalorder %s156, 31
        %s158 = scalar_select %p157, %s156, 31
        %s159 = smul.addr %s158, 4
        %s160 = scalar_lea.vmem %s0, %s159
        %s161 = smul.u32 16, %s10
      $region32: #{_lambda_.1} parent=27 // pred_fallthru
        _
    $region28: #{_lambda_.1} parent=5 // pred_fallthru
      _
    %p162 = scmp.le.s32.totalorder 1, %s10
    %p163 = scmp.lt.s32.totalorder %s10, 3
    %p164 = pnand %p162, %p163
    %p165 = pneg %p164
    // Predicated region
    $region33: #{_lambda_.1} parent=5 // pred_check
      _
    $region34: #{_lambda_.1} parent=5 // pred_check_branch
      %167 = sbr.rel (%p164) target = $region36
    $region35: #{_lambda_.1} parent=5 // pred_region
      %s168 = ssub.s32 %s10, 1
      %s169 = smul.u32 16, %s15
      %p170 = scmp.lt.s32.totalorder %s169, 31
      %s171 = scalar_select %p170, %s169, 31
      %s172 = smul.addr %s171, 4
      %s173 = scalar_lea.vmem %s0, %s172
      %p174 = pneg %p36
      %p175 = pneg %p33
      %p176 = pneg %p57
      %p177 = pneg %p54
      %p178 = pneg %p78
      %p179 = pneg %p75
      %p180 = pneg %p99
      %p181 = pneg %p96
      %p182 = pneg %p125
      %p183 = pneg %p122
      %s184 = smul.u32 16, %s15
      %p185 = scmp.lt.s32.totalorder %s184, 31
      %s186 = scalar_select %p185, %s184, 31
      %s187 = smul.addr %s186, 8
      %s188 = scalar_lea.vmem %s4, %s187
      %s189 = smul.u32 16, %s15
      %p190 = scmp.lt.s32.totalorder %s189, 31
      %s191 = scalar_select %p190, %s189, 31
      %s192 = smul.addr %s191, 4
      %s193 = scalar_lea.vmem %s0, %s192
      %s194 = smul.u32 16, %s15
      %s195 = smul.u32 16, %s15
      %p196 = scmp.lt.s32.totalorder %s195, 31
      %s197 = scalar_select %p196, %s195, 31
      %s198 = smul.addr %s197, 8
      %s199 = scalar_lea.vmem %s4, %s198
      %s200 = smul.u32 16, %s15
      %v202 = vld [vmem:[%s193] sm:$0xf]
      %v203 = vld [vmem:[%s193 + $0x4] sm:$0xf]
      %v204 = vld [vmem:[%s193 + $0x8] sm:$0xf]
      %v205 = vld [vmem:[%s193 + $0xc] sm:$0xf]
      %v206 = vld [vmem:[%s193 + $0x10] sm:$0xf]
      %v207 = vld [vmem:[%s193 + $0x14] sm:$0xf]
      %v208 = vld [vmem:[%s193 + $0x18] sm:$0xf]
      %v209 = vld [vmem:[%s193 + $0x1c] sm:$0xf]
      %v210 = vld [vmem:[%s193 + $0x20] sm:$0xf]
      %v211 = vld [vmem:[%s193 + $0x24] sm:$0xf]
      %v212 = vld [vmem:[%s193 + $0x28] sm:$0xf]
      %v213 = vld [vmem:[%s193 + $0x2c] sm:$0xf]
      %v214 = vld [vmem:[%s193 + $0x30] sm:$0xf]
      %v215 = vld [vmem:[%s193 + $0x34] sm:$0xf]
      %v216 = vld [vmem:[%s193 + $0x38] sm:$0xf]
      %v217 = vld [vmem:[%s193 + $0x3c] sm:$0xf]
      %v218 = vld [vmem:[%s1] sm:$0xf]
      %v219 = vld [vmem:[%s1 + $0x4] sm:$0xf]
      %v220 = vld [vmem:[%s1 + $0x8] sm:$0xf]
      %v221 = vld [vmem:[%s1 + $0xc] sm:$0xf]
      %v238 = vunpack.c.l.b16 %v202
      %v239 = vunpack.c.l.b16 %v203
      %v240 = vunpack.c.l.b16 %v204
      %v241 = vunpack.c.l.b16 %v205
      %v242 = vunpack.c.l.b16 %v206
      %v243 = vunpack.c.l.b16 %v207
      %v244 = vunpack.c.l.b16 %v208
      %v245 = vunpack.c.l.b16 %v209
      %v246 = vunpack.c.l.b16 %v210
      %v247 = vunpack.c.l.b16 %v211
      %v248 = vunpack.c.l.b16 %v212
      %v249 = vunpack.c.l.b16 %v213
      %v250 = vunpack.c.l.b16 %v214
      %v251 = vunpack.c.l.b16 %v215
      %v252 = vunpack.c.l.b16 %v216
      %v253 = vunpack.c.l.b16 %v217
      %v254 = vpack.c.b16 %v239, %v238
      %v255 = vpack.c.b16 %v241, %v240
      %v256 = vpack.c.b16 %v243, %v242
      %v257 = vpack.c.b16 %v245, %v244
      %v258 = vpack.c.b16 %v247, %v246
      %v259 = vpack.c.b16 %v249, %v248
      %v260 = vpack.c.b16 %v251, %v250
      %v261 = vpack.c.b16 %v253, %v252
      %v266 = vunpack.c.l.b16 %v218
      %v267 = vunpack.c.l.b16 %v219
      %v268 = vunpack.c.l.b16 %v220
      %v269 = vunpack.c.l.b16 %v221
      %v270 = vpack.c.b16 %v267, %v266
      %v271 = vpack.c.b16 %v269, %v268
      %vm274 = vcmask 261120
      %v276 = vsel %vm274, %v254, 0
      %v279 = vsel %vm274, %v255, 0
      %v282 = vsel %vm274, %v256, 0
      %v285 = vsel %vm274, %v257, 0
      %v288 = vsel %vm274, %v258, 0
      %v291 = vsel %vm274, %v259, 0
      %v294 = vsel %vm274, %v260, 0
      %v297 = vsel %vm274, %v261, 0
      %299 = vmatpush.bf16.msra.mxu0 0
      %300 = vmatpush.bf16.msra.mxu0 0
      %301 = vmatpush.bf16.msra.mxu0 0
      %302 = vmatpush.bf16.msra.mxu0 0
      %303 = vmatpush.bf16.msra.mxu0 0
      %304 = vmatpush.bf16.msra.mxu0 0
      %305 = vmatpush.bf16.msra.mxu0 %v271
      %306 = vmatpush.bf16.msra.mxu0 %v270
      %307 = vmatmul.bf16.gmra.mxu0 %v276
      %v308 = vpop.f32.mrf.mxu0
      %v309 = vadd.f32 0.0, %v308
      %v310 = vpop.f32.mrf.mxu0
      %v311 = vadd.f32 0.0, %v310
      %312 = vmatmul.bf16.gmra.mxu0 %v279
      %v313 = vpop.f32.mrf.mxu0
      %v314 = vadd.f32 0.0, %v313
      %v315 = vpop.f32.mrf.mxu0
      %v316 = vadd.f32 0.0, %v315
      %317 = vmatmul.bf16.gmra.mxu0 %v282
      %v318 = vpop.f32.mrf.mxu0
      %v319 = vadd.f32 0.0, %v318
      %v320 = vpop.f32.mrf.mxu0
      %v321 = vadd.f32 0.0, %v320
      %322 = vmatmul.bf16.gmra.mxu0 %v285
      %v323 = vpop.f32.mrf.mxu0
      %v324 = vadd.f32 0.0, %v323
      %v325 = vpop.f32.mrf.mxu0
      %v326 = vadd.f32 0.0, %v325
      %327 = vmatmul.bf16.gmra.mxu0 %v288
      %v328 = vpop.f32.mrf.mxu0
      %v329 = vadd.f32 0.0, %v328
      %v330 = vpop.f32.mrf.mxu0
      %v331 = vadd.f32 0.0, %v330
      %332 = vmatmul.bf16.gmra.mxu0 %v291
      %v333 = vpop.f32.mrf.mxu0
      %v334 = vadd.f32 0.0, %v333
      %v335 = vpop.f32.mrf.mxu0
      %v336 = vadd.f32 0.0, %v335
      %337 = vmatmul.bf16.gmra.mxu0 %v294
      %v338 = vpop.f32.mrf.mxu0
      %v339 = vadd.f32 0.0, %v338
      %v340 = vpop.f32.mrf.mxu0
      %v341 = vadd.f32 0.0, %v340
      %342 = vmatmul.bf16.gmra.mxu0 %v297
      %v343 = vpop.f32.mrf.mxu0
      %v344 = vadd.f32 0.0, %v343
      %v345 = vpop.f32.mrf.mxu0
      %v346 = vadd.f32 0.0, %v345
      %347 = vdwg.mxu0
      %v348 = vmax.f32 %v309, 0.0
      %v349 = vmax.f32 %v311, 0.0
      %v350 = vmax.f32 %v314, 0.0
      %v351 = vmax.f32 %v316, 0.0
      %v352 = vmax.f32 %v319, 0.0
      %v353 = vmax.f32 %v321, 0.0
      %v354 = vmax.f32 %v324, 0.0
      %v355 = vmax.f32 %v326, 0.0
      %v356 = vmax.f32 %v329, 0.0
      %v357 = vmax.f32 %v331, 0.0
      %v358 = vmax.f32 %v334, 0.0
      %v359 = vmax.f32 %v336, 0.0
      %v360 = vmax.f32 %v339, 0.0
      %v361 = vmax.f32 %v341, 0.0
      %v362 = vmax.f32 %v344, 0.0
      %v363 = vmax.f32 %v346, 0.0
      %v364 = vpack.c.bf16 %v349, %v348
      %v365 = vpack.c.bf16 %v351, %v350
      %v366 = vpack.c.bf16 %v353, %v352
      %v367 = vpack.c.bf16 %v355, %v354
      %v368 = vpack.c.bf16 %v357, %v356
      %v369 = vpack.c.bf16 %v359, %v358
      %v370 = vpack.c.bf16 %v361, %v360
      %v371 = vpack.c.bf16 %v363, %v362
      %v372 = vld [vmem:[%s2] sm:$0xf]
      %v373 = vld [vmem:[%s2 + $0x4] sm:$0xf]
      %v374 = vld [vmem:[%s2 + $0x8] sm:$0xf]
      %v375 = vld [vmem:[%s2 + $0xc] sm:$0xf]
      %v376 = vld [vmem:[%s2 + $0x10] sm:$0xf]
      %v377 = vld [vmem:[%s2 + $0x14] sm:$0xf]
      %v378 = vld [vmem:[%s2 + $0x18] sm:$0xf]
      %v379 = vld [vmem:[%s2 + $0x1c] sm:$0xf]
      %v380 = vld [vmem:[%s2 + $0x20] sm:$0xf]
      %v381 = vld [vmem:[%s2 + $0x24] sm:$0xf]
      %v382 = vld [vmem:[%s2 + $0x28] sm:$0xf]
      %v383 = vld [vmem:[%s2 + $0x2c] sm:$0xf]
      %v384 = vld [vmem:[%s2 + $0x30] sm:$0xf]
      %v385 = vld [vmem:[%s2 + $0x34] sm:$0xf]
      %v386 = vld [vmem:[%s2 + $0x38] sm:$0xf]
      %v387 = vld [vmem:[%s2 + $0x3c] sm:$0xf]
      %v404 = vunpack.c.l.b16 %v372
      %v405 = vunpack.c.l.b16 %v373
      %v406 = vunpack.c.l.b16 %v374
      %v407 = vunpack.c.l.b16 %v375
      %v408 = vunpack.c.l.b16 %v376
      %v409 = vunpack.c.l.b16 %v377
      %v410 = vunpack.c.l.b16 %v378
      %v411 = vunpack.c.l.b16 %v379
      %v412 = vunpack.c.l.b16 %v380
      %v413 = vunpack.c.l.b16 %v381
      %v414 = vunpack.c.l.b16 %v382
      %v415 = vunpack.c.l.b16 %v383
      %v416 = vunpack.c.l.b16 %v384
      %v417 = vunpack.c.l.b16 %v385
      %v418 = vunpack.c.l.b16 %v386
      %v419 = vunpack.c.l.b16 %v387
      %v420 = vpack.c.b16 %v405, %v404
      %v421 = vpack.c.b16 %v407, %v406
      %v422 = vpack.c.b16 %v409, %v408
      %v423 = vpack.c.b16 %v411, %v410
      %v424 = vpack.c.b16 %v413, %v412
      %v425 = vpack.c.b16 %v415, %v414
      %v426 = vpack.c.b16 %v417, %v416
      %v427 = vpack.c.b16 %v419, %v418
      %436 = vmatpush.bf16.msra.mxu0 %v427
      %437 = vmatpush.bf16.msra.mxu0 %v426
      %438 = vmatpush.bf16.msra.mxu0 %v425
      %439 = vmatpush.bf16.msra.mxu0 %v424
      %440 = vmatpush.bf16.msra.mxu0 %v423
      %441 = vmatpush.bf16.msra.mxu0 %v422
      %442 = vmatpush.bf16.msra.mxu0 %v421
      %443 = vmatpush.bf16.msra.mxu0 %v420
      %444 = vmatmul.bf16.gmra.mxu0 %v364
      %v445 = vpop.f32.mrf.mxu0
      %v446 = vadd.f32 0.0, %v445
      %v447 = vpop.f32.mrf.mxu0
      %v448 = vadd.f32 0.0, %v447
      %449 = vmatmul.bf16.gmra.mxu0 %v365
      %v450 = vpop.f32.mrf.mxu0
      %v451 = vadd.f32 0.0, %v450
      %v452 = vpop.f32.mrf.mxu0
      %v453 = vadd.f32 0.0, %v452
      %454 = vmatmul.bf16.gmra.mxu0 %v366
      %v455 = vpop.f32.mrf.mxu0
      %v456 = vadd.f32 0.0, %v455
      %v457 = vpop.f32.mrf.mxu0
      %v458 = vadd.f32 0.0, %v457
      %459 = vmatmul.bf16.gmra.mxu0 %v367
      %v460 = vpop.f32.mrf.mxu0
      %v461 = vadd.f32 0.0, %v460
      %v462 = vpop.f32.mrf.mxu0
      %v463 = vadd.f32 0.0, %v462
      %464 = vmatmul.bf16.gmra.mxu0 %v368
      %v465 = vpop.f32.mrf.mxu0
      %v466 = vadd.f32 0.0, %v465
      %v467 = vpop.f32.mrf.mxu0
      %v468 = vadd.f32 0.0, %v467
      %469 = vmatmul.bf16.gmra.mxu0 %v369
      %v470 = vpop.f32.mrf.mxu0
      %v471 = vadd.f32 0.0, %v470
      %v472 = vpop.f32.mrf.mxu0
      %v473 = vadd.f32 0.0, %v472
      %474 = vmatmul.bf16.gmra.mxu0 %v370
      %v475 = vpop.f32.mrf.mxu0
      %v476 = vadd.f32 0.0, %v475
      %v477 = vpop.f32.mrf.mxu0
      %v478 = vadd.f32 0.0, %v477
      %479 = vmatmul.bf16.gmra.mxu0 %v371
      %v480 = vpop.f32.mrf.mxu0
      %v481 = vadd.f32 0.0, %v480
      %v482 = vpop.f32.mrf.mxu0
      %v483 = vadd.f32 0.0, %v482
      %484 = vdwg.mxu0
      %v485 = vmax.f32 %v446, 0.0
      %v486 = vmax.f32 %v448, 0.0
      %v487 = vmax.f32 %v451, 0.0
      %v488 = vmax.f32 %v453, 0.0
      %v489 = vmax.f32 %v456, 0.0
      %v490 = vmax.f32 %v458, 0.0
      %v491 = vmax.f32 %v461, 0.0
      %v492 = vmax.f32 %v463, 0.0
      %v493 = vmax.f32 %v466, 0.0
      %v494 = vmax.f32 %v468, 0.0
      %v495 = vmax.f32 %v471, 0.0
      %v496 = vmax.f32 %v473, 0.0
      %v497 = vmax.f32 %v476, 0.0
      %v498 = vmax.f32 %v478, 0.0
      %v499 = vmax.f32 %v481, 0.0
      %v500 = vmax.f32 %v483, 0.0
      %v501 = vpack.c.bf16 %v486, %v485
      %v502 = vpack.c.bf16 %v488, %v487
      %v503 = vpack.c.bf16 %v490, %v489
      %v504 = vpack.c.bf16 %v492, %v491
      %v505 = vpack.c.bf16 %v494, %v493
      %v506 = vpack.c.bf16 %v496, %v495
      %v507 = vpack.c.bf16 %v498, %v497
      %v508 = vpack.c.bf16 %v500, %v499
      %v509 = vld [vmem:[%s3] sm:$0xf]
      %v510 = vld [vmem:[%s3 + $0x4] sm:$0xf]
      %v511 = vld [vmem:[%s3 + $0x8] sm:$0xf]
      %v512 = vld [vmem:[%s3 + $0xc] sm:$0xf]
      %v513 = vld [vmem:[%s3 + $0x10] sm:$0xf]
      %v514 = vld [vmem:[%s3 + $0x14] sm:$0xf]
      %v515 = vld [vmem:[%s3 + $0x18] sm:$0xf]
      %v516 = vld [vmem:[%s3 + $0x1c] sm:$0xf]
      %v517 = vld [vmem:[%s3 + $0x20] sm:$0xf]
      %v518 = vld [vmem:[%s3 + $0x24] sm:$0xf]
      %v519 = vld [vmem:[%s3 + $0x28] sm:$0xf]
      %v520 = vld [vmem:[%s3 + $0x2c] sm:$0xf]
      %v521 = vld [vmem:[%s3 + $0x30] sm:$0xf]
      %v522 = vld [vmem:[%s3 + $0x34] sm:$0xf]
      %v523 = vld [vmem:[%s3 + $0x38] sm:$0xf]
      %v524 = vld [vmem:[%s3 + $0x3c] sm:$0xf]
      %v541 = vunpack.c.l.b16 %v509
      %v542 = vunpack.c.l.b16 %v510
      %v543 = vunpack.c.l.b16 %v511
      %v544 = vunpack.c.l.b16 %v512
      %v545 = vunpack.c.l.b16 %v513
      %v546 = vunpack.c.l.b16 %v514
      %v547 = vunpack.c.l.b16 %v515
      %v548 = vunpack.c.l.b16 %v516
      %v549 = vunpack.c.l.b16 %v517
      %v550 = vunpack.c.l.b16 %v518
      %v551 = vunpack.c.l.b16 %v519
      %v552 = vunpack.c.l.b16 %v520
      %v553 = vunpack.c.l.b16 %v521
      %v554 = vunpack.c.l.b16 %v522
      %v555 = vunpack.c.l.b16 %v523
      %v556 = vunpack.c.l.b16 %v524
      %v557 = vpack.c.b16 %v542, %v541
      %v558 = vpack.c.b16 %v544, %v543
      %v559 = vpack.c.b16 %v546, %v545
      %v560 = vpack.c.b16 %v548, %v547
      %v561 = vpack.c.b16 %v550, %v549
      %v562 = vpack.c.b16 %v552, %v551
      %v563 = vpack.c.b16 %v554, %v553
      %v564 = vpack.c.b16 %v556, %v555
      %573 = vmatpush.bf16.msra.mxu0 %v564
      %574 = vmatpush.bf16.msra.mxu0 %v563
      %575 = vmatpush.bf16.msra.mxu0 %v562
      %576 = vmatpush.bf16.msra.mxu0 %v561
      %577 = vmatpush.bf16.msra.mxu0 %v560
      %578 = vmatpush.bf16.msra.mxu0 %v559
      %579 = vmatpush.bf16.msra.mxu0 %v558
      %580 = vmatpush.bf16.msra.mxu0 %v557
      %581 = vmatmul.bf16.gmra.mxu0 %v501
      %v582 = vpop.f32.mrf.mxu0
      %v583 = vadd.f32 0.0, %v582
      %v584 = vpop.f32.mrf.mxu0
      %v585 = vadd.f32 0.0, %v584
      %586 = vmatmul.bf16.gmra.mxu0 %v502
      %v587 = vpop.f32.mrf.mxu0
      %v588 = vadd.f32 0.0, %v587
      %v589 = vpop.f32.mrf.mxu0
      %v590 = vadd.f32 0.0, %v589
      %591 = vmatmul.bf16.gmra.mxu0 %v503
      %v592 = vpop.f32.mrf.mxu0
      %v593 = vadd.f32 0.0, %v592
      %v594 = vpop.f32.mrf.mxu0
      %v595 = vadd.f32 0.0, %v594
      %596 = vmatmul.bf16.gmra.mxu0 %v504
      %v597 = vpop.f32.mrf.mxu0
      %v598 = vadd.f32 0.0, %v597
      %v599 = vpop.f32.mrf.mxu0
      %v600 = vadd.f32 0.0, %v599
      %601 = vmatmul.bf16.gmra.mxu0 %v505
      %v602 = vpop.f32.mrf.mxu0
      %v603 = vadd.f32 0.0, %v602
      %v604 = vpop.f32.mrf.mxu0
      %v605 = vadd.f32 0.0, %v604
      %606 = vmatmul.bf16.gmra.mxu0 %v506
      %v607 = vpop.f32.mrf.mxu0
      %v608 = vadd.f32 0.0, %v607
      %v609 = vpop.f32.mrf.mxu0
      %v610 = vadd.f32 0.0, %v609
      %611 = vmatmul.bf16.gmra.mxu0 %v507
      %v612 = vpop.f32.mrf.mxu0
      %v613 = vadd.f32 0.0, %v612
      %v614 = vpop.f32.mrf.mxu0
      %v615 = vadd.f32 0.0, %v614
      %616 = vmatmul.bf16.gmra.mxu0 %v508
      %v617 = vpop.f32.mrf.mxu0
      %v618 = vadd.f32 0.0, %v617
      %v619 = vpop.f32.mrf.mxu0
      %v620 = vadd.f32 0.0, %v619
      %621 = vdwg.mxu0
      %622 = vst [vmem:[%s199] sm:$0xff] %v583
      %623 = vst [vmem:[%s199 + $0x8] sm:$0xff] %v585
      %624 = vst [vmem:[%s199 + $0x10] sm:$0xff] %v588
      %625 = vst [vmem:[%s199 + $0x18] sm:$0xff] %v590
      %626 = vst [vmem:[%s199 + $0x20] sm:$0xff] %v593
      %627 = vst [vmem:[%s199 + $0x28] sm:$0xff] %v595
      %628 = vst [vmem:[%s199 + $0x30] sm:$0xff] %v598
      %629 = vst [vmem:[%s199 + $0x38] sm:$0xff] %v600
      %630 = vst [vmem:[%s199 + $0x40] sm:$0xff] %v603
      %631 = vst [vmem:[%s199 + $0x48] sm:$0xff] %v605
      %632 = vst [vmem:[%s199 + $0x50] sm:$0xff] %v608
      %633 = vst [vmem:[%s199 + $0x58] sm:$0xff] %v610
      %634 = vst [vmem:[%s199 + $0x60] sm:$0xff] %v613
      %635 = vst [vmem:[%s199 + $0x68] sm:$0xff] %v615
      %636 = vst [vmem:[%s199 + $0x70] sm:$0xff] %v618
      %637 = vst [vmem:[%s199 + $0x78] sm:$0xff] %v620
      %s638 = smul.u32 16, %s15
      %p639 = scmp.lt.s32.totalorder %s638, 31
      %s640 = scalar_select %p639, %s638, 31
      %s641 = smul.addr %s640, 8
      %s642 = scalar_lea.vmem %s4, %s641
      // Predicated region
      $region37: #{_lambda_.1} parent=35 // pred_check
        %p643 = pneg %p122
      $region38: #{_lambda_.1} parent=35 // pred_check_branch
        %645 = sbr.rel (%p643) target = $region40
      $region39: #{_lambda_.1} parent=35 // pred_region
        %s646 = smul.u32 16, %s15
      $region40: #{_lambda_.1} parent=35 // pred_fallthru
        _
    $region36: #{_lambda_.1} parent=5 // pred_fallthru
      _
    %p647 = scmp.le.s32.totalorder 2, %s10
    // Predicated region
    $region41: #{_lambda_.1} parent=5 // pred_check
      %p648 = pneg %p647
    $region42: #{_lambda_.1} parent=5 // pred_check_branch
      %650 = sbr.rel (%p648) target = $region44
    $region43: #{_lambda_.1} parent=5 // pred_region
      %s651 = ssub.s32 %s10, 2
      // Predicated region
      $region45: #{_lambda_.1} parent=43 // pred_check
        %p652 = pneg %p128
      $region46: #{_lambda_.1} parent=43 // pred_check_branch
        %654 = sbr.rel (%p652) target = $region48
      $region47: #{_lambda_.1} parent=43 // pred_region
        %s655 = smul.u32 16, %s16
        %p656 = scmp.lt.s32.totalorder %s655, 31
        %s657 = scalar_select %p656, %s655, 31
        %s658 = smul.addr %s657, 8
        %s659 = scalar_lea.vmem %s4, %s658
      $region48: #{_lambda_.1} parent=43 // pred_fallthru
        _
    $region44: #{_lambda_.1} parent=5 // pred_fallthru
      _
  $region6: #{_lambda_.1} parent=0 // loop_footer
    %s14 = sadd.s32 1, %s10
  $region7: #{_lambda_.1} parent=0 // loop_footer_branch
    %9 = sbr.rel target = $region3
  $region8: #{_lambda_.1} parent=0 // loop_exit
    _

</llo_original>
